<compile_context>
chip_gen: v7x
topology: tpu7x:2x2x1
jax: 0.10.0
libtpu: 0.0.40
codegen_flags: <defaults>
</compile_context>

<pallas_src>
import math
from functools import lru_cache, partial

import jax
import jax.numpy as jnp
from jax.experimental import pallas as pl
from jax.experimental.pallas import tpu as pltpu


# ----------------------------------------------------------------------------------
# VMEM budget: scale to the chip (128 MiB v5e/v6e, 64 MiB v7x), safe fallback.
# ----------------------------------------------------------------------------------
@lru_cache(maxsize=1)
def _vmem_limit_bytes():
    try:
        cap = int(getattr(pltpu.get_tpu_info(), "vmem_capacity_bytes",
                          64 * 1024 * 1024))
    except Exception:
        cap = 64 * 1024 * 1024
    return int(min(100 * 1024 * 1024, cap * 3 // 4))


# ----------------------------------------------------------------------------------
# Fused EncoderBlock kernel.  One grid step handles Nb independent slabs of shape
# (T, E); all projection / MLP GEMMs run with M = Nb*T rows.
# ----------------------------------------------------------------------------------
def _encoder_block_kernel(x_ref, g_ref, b_ref, wqkv_ref, bqkv_ref,
                          wo_ref, bo_ref, w1_ref, b1_ref, w2_ref, b2_ref,
                          o_ref, *, num_heads):
    Nb, T, E = x_ref.shape
    H = num_heads
    Dh = E // H
    M = Nb * T
    scale = 1.0 / math.sqrt(Dh)
    eps = 1e-5

    x = x_ref[...].astype(jnp.float32).reshape(M, E)          # (M, E) f32
    gamma = g_ref[...].astype(jnp.float32)                     # (1, E)
    beta = b_ref[...].astype(jnp.float32)                      # (1, E)

    def layernorm(v):  # shared gamma/beta: the PyTorch module reuses self.norm
        mu = jnp.mean(v, axis=-1, keepdims=True)
        var = jnp.mean(jnp.square(v - mu), axis=-1, keepdims=True)
        return (v - mu) * jax.lax.rsqrt(var + eps) * gamma + beta

    # ---- first LayerNorm ----
    h = layernorm(x)                                            # f32 (M, E)

    # ---- fused QKV projection: one full-width GEMM (M, E) @ (E, 3E) ----
    qkv = jnp.dot(h.astype(jnp.bfloat16), wqkv_ref[...],
                  preferred_element_type=jnp.float32) + bqkv_ref[...]   # (M, 3E) f32

    qn = qkv[:, :E].reshape(Nb, T, E)
    kn = qkv[:, E:2 * E].reshape(Nb, T, E)
    vn = qkv[:, 2 * E:].reshape(Nb, T, E)

    # Head split via static lane slices + leading-axis stack (no >2-D transposes).
    def stack_heads(a):                    # (Nb, T, E) -> (H*Nb, T, Dh), head-major
        return jnp.stack([a[..., hh * Dh:(hh + 1) * Dh] for hh in range(H)],
                         axis=0).reshape(H * Nb, T, Dh)

    q = stack_heads(qn)
    k = stack_heads(kn)
    v = stack_heads(vn)

    # ---- attention core (tiny T x T per head), batched over H*Nb ----
    s = jnp.einsum('bqd,bkd->bqk',
                   q.astype(jnp.bfloat16), k.astype(jnp.bfloat16),
                   preferred_element_type=jnp.float32) * scale           # (H*Nb, T, T)
    s = s - jnp.max(s, axis=-1, keepdims=True)
    p = jnp.exp(s)
    p = p / jnp.sum(p, axis=-1, keepdims=True)     # exact divide (denominator is tiny)
    ctx = jnp.einsum('bqk,bkd->bqd',
                     p.astype(jnp.bfloat16), v.astype(jnp.bfloat16),
                     preferred_element_type=jnp.float32)                  # (H*Nb, T, Dh)

    # Head merge back to (M, E): lane concat of the per-head context slabs.
    ctx4 = ctx.reshape(H, Nb, T, Dh)
    ctx2 = jnp.concatenate([ctx4[hh] for hh in range(H)], axis=-1).reshape(M, E)

    # ---- output projection: one GEMM (M, E) @ (E, E) ----
    attn = jnp.dot(ctx2.astype(jnp.bfloat16), wo_ref[...],
                   preferred_element_type=jnp.float32) + bo_ref[...]      # (M, E)

    # ---- first residual ----
    first = attn + x

    # ---- second LayerNorm (same params: module reuses self.norm) ----
    h2 = layernorm(first)

    # ---- MLP: Linear(E, 4E) -> GELU -> Linear(4E, E) ----
    ff = jnp.dot(h2.astype(jnp.bfloat16), w1_ref[...],
                 preferred_element_type=jnp.float32) + b1_ref[...]
    ff = jax.nn.gelu(ff, approximate=True)   # TODO(synk): exact erf for bit-parity
    ff = jnp.dot(ff.astype(jnp.bfloat16), w2_ref[...],
                 preferred_element_type=jnp.float32) + b2_ref[...]

    # ---- second residual; bf16 activation stream between blocks ----
    o_ref[...] = (ff + first).reshape(Nb, T, E).astype(o_ref.dtype)


def _pick_nb(N, T, target_m=256):
    """Block size along the independent axis: aim for M = Nb*T rows >= ~256,
    but keep >= 2 grid steps when possible so both v7x TensorCores get work."""
    nb = max(1, min(N, target_m // max(T, 1)))
    if N >= 2 and pl.cdiv(N, nb) < 2:
        nb = pl.cdiv(N, 2)
    return nb


def encoder_block_nt(x, blk, *, num_heads):
    """Fused ViT encoder block on (N_independent, T_attention, E) layout."""
    N, T, E = x.shape
    nb = _pick_nb(N, T)
    weights = (blk["gamma"], blk["beta"], blk["wqkv"], blk["bqkv"],
               blk["wo"], blk["bo"], blk["w1"], blk["b1"], blk["w2"], blk["b2"])

    # Constant block index across the grid: the pipeline fetches each weight once
    # and never re-DMAs it (no runtime Buffered(1) probe needed).
    def weight_spec(a):
        return pl.BlockSpec(a.shape, lambda n: (0, 0))

    x_spec = pl.BlockSpec((nb, T, E), lambda n: (n, 0, 0))
    out_spec = pl.BlockSpec((nb, T, E), lambda n: (n, 0, 0))

    kernel = partial(_encoder_block_kernel, num_heads=num_heads)
    return pl.pallas_call(
        kernel,
        out_shape=jax.ShapeDtypeStruct((N, T, E), jnp.bfloat16),
        grid_spec=pltpu.PrefetchScalarGridSpec(
            num_scalar_prefetch=0,
            grid=(pl.cdiv(N, nb),),
            in_specs=[x_spec] + [weight_spec(a) for a in weights],
            out_specs=out_spec,
        ),
        compiler_params=pltpu.CompilerParams(
            dimension_semantics=("parallel",),
            vmem_limit_bytes=_vmem_limit_bytes(),
        ),
    )(x, *weights)


# ----------------------------------------------------------------------------------
# Patch-embedding projection (row-tiled) and MLP head
# ----------------------------------------------------------------------------------
def _linear_kernel(x_ref, w_ref, b_ref, o_ref):
    o_ref[...] = (jnp.dot(x_ref[...].astype(jnp.bfloat16), w_ref[...],
                          preferred_element_type=jnp.float32)
                  + b_ref[...]).astype(o_ref.dtype)


def pallas_linear(x2d, w_bf16, b, *, block_m=512):
    M, K = x2d.shape
    N = w_bf16.shape[1]
    mb = M if M <= block_m else block_m          # full M (always legal) or 8-aligned tile
    return pl.pallas_call(
        _linear_kernel,
        out_shape=jax.ShapeDtypeStruct((M, N), jnp.float32),
        grid_spec=pltpu.PrefetchScalarGridSpec(
            num_scalar_prefetch=0,
            grid=(pl.cdiv(M, mb),),
            in_specs=[pl.BlockSpec((mb, K), lambda i: (i, 0)),
                      pl.BlockSpec((K, N), lambda i: (0, 0)),
                      pl.BlockSpec((1, N), lambda i: (0, 0))],
            out_specs=pl.BlockSpec((mb, N), lambda i: (i, 0)),
        ),
        compiler_params=pltpu.CompilerParams(
            dimension_semantics=("parallel",),
            vmem_limit_bytes=_vmem_limit_bytes(),
        ),
    )(x2d, w_bf16, b)


def _mlp_head_kernel(x_ref, g_ref, beta_ref, w1_ref, b1_ref, w2_ref, b2_ref, o_ref):
    eps = 1e-5
    x = x_ref[...].astype(jnp.float32)
    mu = jnp.mean(x, axis=-1, keepdims=True)
    var = jnp.mean(jnp.square(x - mu), axis=-1, keepdims=True)
    h = (x - mu) * jax.lax.rsqrt(var + eps) * g_ref[...] + beta_ref[...]
    h = jnp.dot(h.astype(jnp.bfloat16), w1_ref[...],
                preferred_element_type=jnp.float32) + b1_ref[...]
    # MLP_head = LayerNorm -> Linear -> Linear (no activation in the module).
    o_ref[...] = (jnp.dot(h.astype(jnp.bfloat16), w2_ref[...],
                          preferred_element_type=jnp.float32)
                  + b2_ref[...]).astype(o_ref.dtype)


def mlp_head(cls_tokens, hp):
    B = cls_tokens.shape[0]
    C = hp["w2"].shape[1]
    return pl.pallas_call(
        _mlp_head_kernel,
        out_shape=jax.ShapeDtypeStruct((B, C), jnp.float32),
    )(cls_tokens, hp["gamma"], hp["beta"], hp["w1"], hp["b1"], hp["w2"], hp["b2"])


# ----------------------------------------------------------------------------------
# Full VisionTransformer forward
# ----------------------------------------------------------------------------------
def extract_patches(images, patch_size):
    # einops: 'b c (h h1) (w w1) -> b (h w) (h1 w1 c)'
    B, C, H, W = images.shape
    hp, wp = H // patch_size, W // patch_size
    x = images.reshape(B, C, hp, patch_size, wp, patch_size)
    x = jnp.transpose(x, (0, 2, 4, 3, 5, 1))                   # b h w h1 w1 c
    return x.reshape(B, hp * wp, patch_size * patch_size * C)


def vision_transformer(images, params, *, patch_size, num_heads):
    emb = params["embedding"]
    B = images.shape[0]
    E = emb["w"].shape[1]

    patches = extract_patches(images, patch_size)               # (B, n, P*P*C)
    n, pdim = patches.shape[1], patches.shape[2]
    proj = pallas_linear(patches.reshape(B * n, pdim), emb["w"], emb["b"])
    proj = proj.reshape(B, n, E)

    tokens = jnp.concatenate([emb["class_token"], proj], axis=1)  # (B, n+1, E)
    tokens = tokens + emb["pos_embedding"]                         # broadcast over seq

    # The PyTorch module feeds this batch-first tensor straight into
    # nn.MultiheadAttention (batch_first=False): dim 0 is the attention sequence and
    # dim 1 is independent.  Keep those semantics; re-layout once so kernel blocks
    # are (Nb, T, E) lane/sublane dense with the independent axis as the grid.
    # bf16 activation stream between encoder blocks (LN math stays f32 in-kernel).
    x = jnp.transpose(tokens, (1, 0, 2)).astype(jnp.bfloat16)     # (n+1, B, E)
    for blk in params["encoder_blocks"]:
        x = encoder_block_nt(x, blk, num_heads=num_heads)

    cls = x[0]                               # == enc_output[:, 0] in the module, (B, E)
    return mlp_head(cls, params["head"])     # (B, num_classes)


# ----------------------------------------------------------------------------------
# Parameter construction
# ----------------------------------------------------------------------------------
def init_vit_params(key, *, batch_size, n_channels, patch_size,
                    latent, num_heads, num_encoders, num_classes):
    hidden = 4 * latent
    patch_dim = patch_size * patch_size * n_channels
    std = 0.02
    keys = jax.random.split(key, num_encoders + 2)

    def dense(k, shape):
        return std * jax.random.normal(k, shape, jnp.float32)

    ke = jax.random.split(keys[0], 4)
    embedding = dict(
        w=dense(ke[0], (patch_dim, latent)).astype(jnp.bfloat16),
        b=dense(ke[1], (1, latent)),
        class_token=jax.random.normal(ke[2], (batch_size, 1, latent), jnp.float32),
        pos_embedding=jax.random.normal(ke[3], (batch_size, 1, latent), jnp.float32),
    )

    def init_block(k):
        kb = jax.random.split(k, 8)
        return dict(
            gamma=jnp.ones((1, latent), jnp.float32),
            beta=jnp.zeros((1, latent), jnp.float32),
            # Fused QKV projection: columns [Q | K | V]; inside each E the columns
            # split contiguously into (head, head_dim), matching nn.MultiheadAttention.
            wqkv=dense(kb[0], (latent, 3 * latent)).astype(jnp.bfloat16),
            bqkv=dense(kb[1], (1, 3 * latent)),
            wo=dense(kb[2], (latent, latent)).astype(jnp.bfloat16),
            bo=dense(kb[3], (1, latent)),
            w1=dense(kb[4], (latent, hidden)).astype(jnp.bfloat16),
            b1=dense(kb[5], (1, hidden)),
            w2=dense(kb[6], (hidden, latent)).astype(jnp.bfloat16),
            b2=dense(kb[7], (1, latent)),
        )

    blocks = [init_block(k) for k in keys[1:1 + num_encoders]]

    kh = jax.random.split(keys[1 + num_encoders], 4)
    head = dict(
        gamma=jnp.ones((1, latent), jnp.float32),
        beta=jnp.zeros((1, latent), jnp.float32),
        w1=dense(kh[0], (latent, latent)).astype(jnp.bfloat16),
        b1=dense(kh[1], (1, latent)),
        w2=dense(kh[2], (latent, num_classes)).astype(jnp.bfloat16),
        b2=dense(kh[3], (1, num_classes)),
    )
    return dict(embedding=embedding, encoder_blocks=blocks, head=head)


# ----------------------------------------------------------------------------------
if __name__ == "__main__":
    # Small shapes consistent with the module (latent divisible by heads, image
    # divisible by patch_size): 48x48x3 image, 16x16 patches -> 9 patches + cls token.
    B, C, IMG = 2, 3, 48
    PATCH = 16
    LATENT = 128
    HEADS = 4
    ENCODERS = 2
    CLASSES = 10

    key = jax.random.PRNGKey(0)
    k_img, k_par = jax.random.split(key)

    images = jax.random.normal(k_img, (B, C, IMG, IMG), jnp.float32)
    params = init_vit_params(k_par, batch_size=B, n_channels=C, patch_size=PATCH,
                             latent=LATENT, num_heads=HEADS,
                             num_encoders=ENCODERS, num_classes=CLASSES)

    logits = vision_transformer(images, params, patch_size=PATCH, num_heads=HEADS)
    logits = jax.block_until_ready(logits)
    assert logits.shape == (B, CLASSES)
    assert bool(jnp.all(jnp.isfinite(logits)))
    print("KERNEL_OK")
</pallas_src>

<mosaic_0001>
module attributes {stable_mosaic.version = 11 : i64} {
  func.func @_linear_kernel(%arg0: i32, %arg1: memref<18x768xf32, #tpu.memory_space<vmem>>, %arg2: memref<768x128xbf16, #tpu.memory_space<vmem>>, %arg3: memref<1x128xf32, #tpu.memory_space<vmem>>, %arg4: memref<18x128xf32, #tpu.memory_space<vmem>>) attributes {dimension_semantics = [#tpu.dimension_semantics<parallel>], iteration_bounds = array<i64: 1>, scalar_prefetch = 0 : i64, scratch_operands = 0 : i64, tpu.core_type = #tpu.core_type<tc>, window_params = [{transform_indices = @transform_0, window_bounds = array<i64: 18, 768>}, {pipeline_mode = #tpu.pipeline_mode<synchronous>, transform_indices = @transform_1, window_bounds = array<i64: 768, 128>}, {pipeline_mode = #tpu.pipeline_mode<synchronous>, transform_indices = @transform_2, window_bounds = array<i64: 1, 128>}, {transform_indices = @transform_3, window_bounds = array<i64: 18, 128>}]} {
    %c0 = arith.constant 0 : index
    %c0_0 = arith.constant 0 : index
    %0 = vector.load %arg1[%c0, %c0_0] : memref<18x768xf32, #tpu.memory_space<vmem>>, vector<18x768xf32>
    %1 = arith.truncf %0 : vector<18x768xf32> to vector<18x768xbf16>
    %c0_1 = arith.constant 0 : index
    %c0_2 = arith.constant 0 : index
    %2 = vector.load %arg2[%c0_1, %c0_2] : memref<768x128xbf16, #tpu.memory_space<vmem>>, vector<768x128xbf16>
    %cst = arith.constant dense<0.000000e+00> : vector<18x128xf32>
    %3 = tpu.matmul %1, %2, %cst {dimension_numbers = #tpu.dot_dimension_numbers<[1], [0], [0], [1], [0, 0, 1, 1], [], []>} : vector<18x768xbf16>, vector<768x128xbf16>, vector<18x128xf32> -> vector<18x128xf32>
    %c0_3 = arith.constant 0 : index
    %c0_4 = arith.constant 0 : index
    %4 = vector.load %arg3[%c0_3, %c0_4] : memref<1x128xf32, #tpu.memory_space<vmem>>, vector<1x128xf32>
    %5 = vector.broadcast %4 : vector<1x128xf32> to vector<18x128xf32>
    %6 = arith.addf %3, %5 : vector<18x128xf32>
    %c0_5 = arith.constant 0 : index
    %c0_6 = arith.constant 0 : index
    %7 = vector.load %arg4[%c0_5, %c0_6] : memref<18x128xf32, #tpu.memory_space<vmem>>, vector<18x128xf32>
    tpu.vector_store %arg4[%c0_5, %c0_6], %6 {strides = array<i32>} : memref<18x128xf32, #tpu.memory_space<vmem>>, vector<18x128xf32>,
    return
  }
  func.func @transform_0(%arg0: i32) -> (i32, i32) {
    %c0_i32 = arith.constant 0 : i32
    %c0_i32_0 = arith.constant 0 : i32
    return %arg0, %c0_i32 : i32, i32
  }
  func.func @transform_1(%arg0: i32) -> (i32, i32) {
    %c0_i32 = arith.constant 0 : i32
    %c0_i32_0 = arith.constant 0 : i32
    %c0_i32_1 = arith.constant 0 : i32
    return %c0_i32, %c0_i32_0 : i32, i32
  }
  func.func @transform_2(%arg0: i32) -> (i32, i32) {
    %c0_i32 = arith.constant 0 : i32
    %c0_i32_0 = arith.constant 0 : i32
    %c0_i32_1 = arith.constant 0 : i32
    return %c0_i32, %c0_i32_0 : i32, i32
  }
  func.func @transform_3(%arg0: i32) -> (i32, i32) {
    %c0_i32 = arith.constant 0 : i32
    %c0_i32_0 = arith.constant 0 : i32
    return %arg0, %c0_i32 : i32, i32
  }
}

</mosaic_0001>

<llo_original>
// kernel: tpu_custom_call.1
$region0: #{tpu_custom_call.1}
  #allocation0 [shape = 'u32[]', space=smem, size = 0x4, offset = 0x4, fixed_abs, tag = 'smem constant byte address 0x4 - core index']
  #allocation1 [shape = 'u32[144,128]{1,0:T(1,128)}', space=vmem, size = 0x12000, scoped, tag = 'internal scratch']
  %s0 = inlined_call_operand.hbm [shape: f32[18,768], index: 0, kind: input, shape index: {}]
  %s1 = inlined_call_operand.hbm [shape: bf16[768,128], index: 1, kind: input, shape index: {}]
  %s2 = inlined_call_operand.vmem [shape: f32[1,128], index: 2, kind: input, shape index: {}]
  %s3 = inlined_call_operand.hbm [shape: f32[18,128], index: 3, kind: output, shape index: {}]
  %s4 = sld [smem:[#allocation0]]
  $region30: #{tpu_custom_call.1} parent=0
    _
  %s6 = ssub.s32 1, %s4
  %s7 = scalar_select 0, %s6, %s4
  $region1: #{tpu_custom_call.1} parent=0
    #allocation2 [shape = 'u8[73728]{0}', space=vmem, size = 0x12000, scoped, tag = 'input window, operand 0, single buffered']
    #allocation3 [shape = 's32[1]{0}', space=sflag, size = 0x4, scoped, tag = 'scoped memory for tpu_custom_call.1']
    #allocation4 [shape = 's32[1]{0}', space=sflag, size = 0x4, scoped, tag = 'scoped memory for tpu_custom_call.1']
    #allocation5 [shape = 'u8[196608]{0}', space=vmem, size = 0x30000, scoped, tag = 'input window, operand 1, single buffered']
    #allocation6 [shape = 's32[1]{0}', space=sflag, size = 0x4, scoped, tag = 'scoped memory for tpu_custom_call.1']
    #allocation7 [shape = 'u8[12288]{0}', space=vmem, size = 0x3000, scoped, tag = 'output window, operand 0, single buffered']
    %8 = vsyncpa [#allocation3], 0
    %9 = vsyncpa [#allocation6], 0
    %10 = vsyncpa [#allocation4], 0
    // Predicated region
    $region2: #{tpu_custom_call.1} parent=1 // pred_check
      _
    $region3: #{tpu_custom_call.1} parent=1 // pred_check_branch
      %12 = sbr.rel (0) target = $region5
    $region4: #{tpu_custom_call.1} parent=1 // pred_region
      %s14 = ssub.s32 2304, 2304
      %15 = vsyncadd [#allocation3], %s14
      %s16 = sshll.u32 [#allocation2], 4
      %s17 = int_to_ptr.vmem [resolvable:$true] %s16
      %22 = dma.hbm_to_vmem [thread:$0]  %s0, 2304, %s17, [#allocation3], 768, 768, 48
    $region5: #{tpu_custom_call.1} parent=1 // pred_fallthru
      _
    // Predicated region
    $region6: #{tpu_custom_call.1} parent=1 // pred_check
      _
    $region7: #{tpu_custom_call.1} parent=1 // pred_check_branch
      %24 = sbr.rel (0) target = $region9
    $region8: #{tpu_custom_call.1} parent=1 // pred_region
      %s26 = ssub.s32 6144, 6144
      %27 = vsyncadd [#allocation6], %s26
      %s28 = sshll.u32 [#allocation5], 4
      %s29 = int_to_ptr.vmem [resolvable:$true] %s28
      %34 = dma.hbm_to_vmem [thread:$0]  %s1, 6144, %s29, [#allocation6], 64, 64, 4
    $region9: #{tpu_custom_call.1} parent=1 // pred_fallthru
      _
    // Predicated region
    $region10: #{tpu_custom_call.1} parent=1 // pred_check
      _
    $region11: #{tpu_custom_call.1} parent=1 // pred_check_branch
      %36 = sbr.rel (0) target = $region13
    $region12: #{tpu_custom_call.1} parent=1 // pred_region
      _
    $region13: #{tpu_custom_call.1} parent=1 // pred_fallthru
      _
    // Predicated region
    $region14: #{tpu_custom_call.1} parent=1 // pred_check
      _
    $region15: #{tpu_custom_call.1} parent=1 // pred_check_branch
      %38 = sbr.rel (0) target = $region17
    $region16: #{tpu_custom_call.1} parent=1 // pred_region
      %39 = dma.done [#allocation3], 2304
    $region17: #{tpu_custom_call.1} parent=1 // pred_fallthru
      _
    // Predicated region
    $region18: #{tpu_custom_call.1} parent=1 // pred_check
      _
    $region19: #{tpu_custom_call.1} parent=1 // pred_check_branch
      %41 = sbr.rel (0) target = $region21
    $region20: #{tpu_custom_call.1} parent=1 // pred_region
      %42 = dma.done [#allocation6], 6144
    $region21: #{tpu_custom_call.1} parent=1 // pred_fallthru
      _
    %v44 = vld [vmem:[#allocation2] sm:$0xff]
    %v45 = vld [vmem:[#allocation2 + $0x8] sm:$0xff]
    %v46 = vld [vmem:[#allocation2 + $0x10] sm:$0xff]
    %v47 = vld [vmem:[#allocation2 + $0x18] sm:$0xff]
    %v48 = vld [vmem:[#allocation2 + $0x20] sm:$0xff]
    %v49 = vld [vmem:[#allocation2 + $0x28] sm:$0xff]
    %v50 = vld [vmem:[#allocation2 + $0x30] sm:$0xff]
    %v51 = vld [vmem:[#allocation2 + $0x38] sm:$0xff]
    %v52 = vld [vmem:[#allocation2 + $0x40] sm:$0xff]
    %v53 = vld [vmem:[#allocation2 + $0x48] sm:$0xff]
    %v54 = vld [vmem:[#allocation2 + $0x50] sm:$0xff]
    %v55 = vld [vmem:[#allocation2 + $0x58] sm:$0xff]
    %v56 = vld [vmem:[#allocation2 + $0x60] sm:$0x3]
    %v57 = vld [vmem:[#allocation2 + $0x68] sm:$0x3]
    %v58 = vld [vmem:[#allocation2 + $0x70] sm:$0x3]
    %v59 = vld [vmem:[#allocation2 + $0x78] sm:$0x3]
    %v60 = vld [vmem:[#allocation2 + $0x80] sm:$0x3]
    %v61 = vld [vmem:[#allocation2 + $0x88] sm:$0x3]
    %v62 = vpack.c.bf16 %v50, %v44
    %v63 = vpack.c.bf16 %v51, %v45
    %v64 = vpack.c.bf16 %v52, %v46
    %v65 = vpack.c.bf16 %v53, %v47
    %v66 = vpack.c.bf16 %v54, %v48
    %v67 = vpack.c.bf16 %v55, %v49
    %v68 = vpack.c.bf16 %v56, %v56
    %v69 = vpack.c.bf16 %v57, %v57
    %v70 = vpack.c.bf16 %v58, %v58
    %v71 = vpack.c.bf16 %v59, %v59
    %v72 = vpack.c.bf16 %v60, %v60
    %v73 = vpack.c.bf16 %v61, %v61
    %v74 = vld [vmem:[#allocation5] sm:$0xf]
    %v75 = vld [vmem:[#allocation5 + $0x4] sm:$0xf]
    %v76 = vld [vmem:[#allocation5 + $0x8] sm:$0xf]
    %v77 = vld [vmem:[#allocation5 + $0xc] sm:$0xf]
    %v78 = vld [vmem:[#allocation5 + $0x10] sm:$0xf]
    %v79 = vld [vmem:[#allocation5 + $0x14] sm:$0xf]
    %v80 = vld [vmem:[#allocation5 + $0x18] sm:$0xf]
    %v81 = vld [vmem:[#allocation5 + $0x1c] sm:$0xf]
    %v82 = vld [vmem:[#allocation5 + $0x20] sm:$0xf]
    %v83 = vld [vmem:[#allocation5 + $0x24] sm:$0xf]
    %v84 = vld [vmem:[#allocation5 + $0x28] sm:$0xf]
    %v85 = vld [vmem:[#allocation5 + $0x2c] sm:$0xf]
    %v86 = vld [vmem:[#allocation5 + $0x30] sm:$0xf]
    %v87 = vld [vmem:[#allocation5 + $0x34] sm:$0xf]
    %v88 = vld [vmem:[#allocation5 + $0x38] sm:$0xf]
    %v89 = vld [vmem:[#allocation5 + $0x3c] sm:$0xf]
    %v90 = vld [vmem:[#allocation5 + $0x40] sm:$0xf]
    %v91 = vld [vmem:[#allocation5 + $0x44] sm:$0xf]
    %v92 = vld [vmem:[#allocation5 + $0x48] sm:$0xf]
    %v93 = vld [vmem:[#allocation5 + $0x4c] sm:$0xf]
    %v94 = vld [vmem:[#allocation5 + $0x50] sm:$0xf]
    %v95 = vld [vmem:[#allocation5 + $0x54] sm:$0xf]
    %v96 = vld [vmem:[#allocation5 + $0x58] sm:$0xf]
    %v97 = vld [vmem:[#allocation5 + $0x5c] sm:$0xf]
    %v98 = vld [vmem:[#allocation5 + $0x60] sm:$0xf]
    %v99 = vld [vmem:[#allocation5 + $0x64] sm:$0xf]
    %v100 = vld [vmem:[#allocation5 + $0x68] sm:$0xf]
    %v101 = vld [vmem:[#allocation5 + $0x6c] sm:$0xf]
    %v102 = vld [vmem:[#allocation5 + $0x70] sm:$0xf]
    %v103 = vld [vmem:[#allocation5 + $0x74] sm:$0xf]
    %v104 = vld [vmem:[#allocation5 + $0x78] sm:$0xf]
    %v105 = vld [vmem:[#allocation5 + $0x7c] sm:$0xf]
    %v106 = vld [vmem:[#allocation5 + $0x80] sm:$0xf]
    %v107 = vld [vmem:[#allocation5 + $0x84] sm:$0xf]
    %v108 = vld [vmem:[#allocation5 + $0x88] sm:$0xf]
    %v109 = vld [vmem:[#allocation5 + $0x8c] sm:$0xf]
    %v110 = vld [vmem:[#allocation5 + $0x90] sm:$0xf]
    %v111 = vld [vmem:[#allocation5 + $0x94] sm:$0xf]
    %v112 = vld [vmem:[#allocation5 + $0x98] sm:$0xf]
    %v113 = vld [vmem:[#allocation5 + $0x9c] sm:$0xf]
    %v114 = vld [vmem:[#allocation5 + $0xa0] sm:$0xf]
    %v115 = vld [vmem:[#allocation5 + $0xa4] sm:$0xf]
    %v116 = vld [vmem:[#allocation5 + $0xa8] sm:$0xf]
    %v117 = vld [vmem:[#allocation5 + $0xac] sm:$0xf]
    %v118 = vld [vmem:[#allocation5 + $0xb0] sm:$0xf]
    %v119 = vld [vmem:[#allocation5 + $0xb4] sm:$0xf]
    %v120 = vld [vmem:[#allocation5 + $0xb8] sm:$0xf]
    %v121 = vld [vmem:[#allocation5 + $0xbc] sm:$0xf]
    %v122 = vld [vmem:[#allocation5 + $0xc0] sm:$0xf]
    %v123 = vld [vmem:[#allocation5 + $0xc4] sm:$0xf]
    %v124 = vld [vmem:[#allocation5 + $0xc8] sm:$0xf]
    %v125 = vld [vmem:[#allocation5 + $0xcc] sm:$0xf]
    %v126 = vld [vmem:[#allocation5 + $0xd0] sm:$0xf]
    %v127 = vld [vmem:[#allocation5 + $0xd4] sm:$0xf]
    %v128 = vld [vmem:[#allocation5 + $0xd8] sm:$0xf]
    %v129 = vld [vmem:[#allocation5 + $0xdc] sm:$0xf]
    %v130 = vld [vmem:[#allocation5 + $0xe0] sm:$0xf]
    %v131 = vld [vmem:[#allocation5 + $0xe4] sm:$0xf]
    %v132 = vld [vmem:[#allocation5 + $0xe8] sm:$0xf]
    %v133 = vld [vmem:[#allocation5 + $0xec] sm:$0xf]
    %v134 = vld [vmem:[#allocation5 + $0xf0] sm:$0xf]
    %v135 = vld [vmem:[#allocation5 + $0xf4] sm:$0xf]
    %v136 = vld [vmem:[#allocation5 + $0xf8] sm:$0xf]
    %v137 = vld [vmem:[#allocation5 + $0xfc] sm:$0xf]
    %v138 = vld [vmem:[#allocation5 + $0x100] sm:$0xf]
    %v139 = vld [vmem:[#allocation5 + $0x104] sm:$0xf]
    %v140 = vld [vmem:[#allocation5 + $0x108] sm:$0xf]
    %v141 = vld [vmem:[#allocation5 + $0x10c] sm:$0xf]
    %v142 = vld [vmem:[#allocation5 + $0x110] sm:$0xf]
    %v143 = vld [vmem:[#allocation5 + $0x114] sm:$0xf]
    %v144 = vld [vmem:[#allocation5 + $0x118] sm:$0xf]
    %v145 = vld [vmem:[#allocation5 + $0x11c] sm:$0xf]
    %v146 = vld [vmem:[#allocation5 + $0x120] sm:$0xf]
    %v147 = vld [vmem:[#allocation5 + $0x124] sm:$0xf]
    %v148 = vld [vmem:[#allocation5 + $0x128] sm:$0xf]
    %v149 = vld [vmem:[#allocation5 + $0x12c] sm:$0xf]
    %v150 = vld [vmem:[#allocation5 + $0x130] sm:$0xf]
    %v151 = vld [vmem:[#allocation5 + $0x134] sm:$0xf]
    %v152 = vld [vmem:[#allocation5 + $0x138] sm:$0xf]
    %v153 = vld [vmem:[#allocation5 + $0x13c] sm:$0xf]
    %v154 = vld [vmem:[#allocation5 + $0x140] sm:$0xf]
    %v155 = vld [vmem:[#allocation5 + $0x144] sm:$0xf]
    %v156 = vld [vmem:[#allocation5 + $0x148] sm:$0xf]
    %v157 = vld [vmem:[#allocation5 + $0x14c] sm:$0xf]
    %v158 = vld [vmem:[#allocation5 + $0x150] sm:$0xf]
    %v159 = vld [vmem:[#allocation5 + $0x154] sm:$0xf]
    %v160 = vld [vmem:[#allocation5 + $0x158] sm:$0xf]
    %v161 = vld [vmem:[#allocation5 + $0x15c] sm:$0xf]
    %v162 = vld [vmem:[#allocation5 + $0x160] sm:$0xf]
    %v163 = vld [vmem:[#allocation5 + $0x164] sm:$0xf]
    %v164 = vld [vmem:[#allocation5 + $0x168] sm:$0xf]
    %v165 = vld [vmem:[#allocation5 + $0x16c] sm:$0xf]
    %v166 = vld [vmem:[#allocation5 + $0x170] sm:$0xf]
    %v167 = vld [vmem:[#allocation5 + $0x174] sm:$0xf]
    %v168 = vld [vmem:[#allocation5 + $0x178] sm:$0xf]
    %v169 = vld [vmem:[#allocation5 + $0x17c] sm:$0xf]
    %v170 = vld [vmem:[%s2] sm:$0x1]
    %v172 = vlaneseq
    %v173 = vshrl.u32 %v172, 7
    %v174 = vsub.s32 0, %v173
    %v175 = vrot.slane %v170, %v174
    %v273 = vunpack.c.l.b16 %v74
    %v274 = vunpack.c.l.b16 %v75
    %v275 = vunpack.c.l.b16 %v76
    %v276 = vunpack.c.l.b16 %v77
    %v277 = vunpack.c.l.b16 %v78
    %v278 = vunpack.c.l.b16 %v79
    %v279 = vunpack.c.l.b16 %v80
    %v280 = vunpack.c.l.b16 %v81
    %v281 = vunpack.c.l.b16 %v82
    %v282 = vunpack.c.l.b16 %v83
    %v283 = vunpack.c.l.b16 %v84
    %v284 = vunpack.c.l.b16 %v85
    %v285 = vunpack.c.l.b16 %v86
    %v286 = vunpack.c.l.b16 %v87
    %v287 = vunpack.c.l.b16 %v88
    %v288 = vunpack.c.l.b16 %v89
    %v289 = vunpack.c.l.b16 %v90
    %v290 = vunpack.c.l.b16 %v91
    %v291 = vunpack.c.l.b16 %v92
    %v292 = vunpack.c.l.b16 %v93
    %v293 = vunpack.c.l.b16 %v94
    %v294 = vunpack.c.l.b16 %v95
    %v295 = vunpack.c.l.b16 %v96
    %v296 = vunpack.c.l.b16 %v97
    %v297 = vunpack.c.l.b16 %v98
    %v298 = vunpack.c.l.b16 %v99
    %v299 = vunpack.c.l.b16 %v100
    %v300 = vunpack.c.l.b16 %v101
    %v301 = vunpack.c.l.b16 %v102
    %v302 = vunpack.c.l.b16 %v103
    %v303 = vunpack.c.l.b16 %v104
    %v304 = vunpack.c.l.b16 %v105
    %v305 = vunpack.c.l.b16 %v106
    %v306 = vunpack.c.l.b16 %v107
    %v307 = vunpack.c.l.b16 %v108
    %v308 = vunpack.c.l.b16 %v109
    %v309 = vunpack.c.l.b16 %v110
    %v310 = vunpack.c.l.b16 %v111
    %v311 = vunpack.c.l.b16 %v112
    %v312 = vunpack.c.l.b16 %v113
    %v313 = vunpack.c.l.b16 %v114
    %v314 = vunpack.c.l.b16 %v115
    %v315 = vunpack.c.l.b16 %v116
    %v316 = vunpack.c.l.b16 %v117
    %v317 = vunpack.c.l.b16 %v118
    %v318 = vunpack.c.l.b16 %v119
    %v319 = vunpack.c.l.b16 %v120
    %v320 = vunpack.c.l.b16 %v121
    %v321 = vunpack.c.l.b16 %v122
    %v322 = vunpack.c.l.b16 %v123
    %v323 = vunpack.c.l.b16 %v124
    %v324 = vunpack.c.l.b16 %v125
    %v325 = vunpack.c.l.b16 %v126
    %v326 = vunpack.c.l.b16 %v127
    %v327 = vunpack.c.l.b16 %v128
    %v328 = vunpack.c.l.b16 %v129
    %v329 = vunpack.c.l.b16 %v130
    %v330 = vunpack.c.l.b16 %v131
    %v331 = vunpack.c.l.b16 %v132
    %v332 = vunpack.c.l.b16 %v133
    %v333 = vunpack.c.l.b16 %v134
    %v334 = vunpack.c.l.b16 %v135
    %v335 = vunpack.c.l.b16 %v136
    %v336 = vunpack.c.l.b16 %v137
    %v337 = vunpack.c.l.b16 %v138
    %v338 = vunpack.c.l.b16 %v139
    %v339 = vunpack.c.l.b16 %v140
    %v340 = vunpack.c.l.b16 %v141
    %v341 = vunpack.c.l.b16 %v142
    %v342 = vunpack.c.l.b16 %v143
    %v343 = vunpack.c.l.b16 %v144
    %v344 = vunpack.c.l.b16 %v145
    %v345 = vunpack.c.l.b16 %v146
    %v346 = vunpack.c.l.b16 %v147
    %v347 = vunpack.c.l.b16 %v148
    %v348 = vunpack.c.l.b16 %v149
    %v349 = vunpack.c.l.b16 %v150
    %v350 = vunpack.c.l.b16 %v151
    %v351 = vunpack.c.l.b16 %v152
    %v352 = vunpack.c.l.b16 %v153
    %v353 = vunpack.c.l.b16 %v154
    %v354 = vunpack.c.l.b16 %v155
    %v355 = vunpack.c.l.b16 %v156
    %v356 = vunpack.c.l.b16 %v157
    %v357 = vunpack.c.l.b16 %v158
    %v358 = vunpack.c.l.b16 %v159
    %v359 = vunpack.c.l.b16 %v160
    %v360 = vunpack.c.l.b16 %v161
    %v361 = vunpack.c.l.b16 %v162
    %v362 = vunpack.c.l.b16 %v163
    %v363 = vunpack.c.l.b16 %v164
    %v364 = vunpack.c.l.b16 %v165
    %v365 = vunpack.c.l.b16 %v166
    %v366 = vunpack.c.l.b16 %v167
    %v367 = vunpack.c.l.b16 %v168
    %v368 = vunpack.c.l.b16 %v169
    %v369 = vpack.c.b16 %v274, %v273
    %v370 = vpack.c.b16 %v276, %v275
    %v371 = vpack.c.b16 %v278, %v277
    %v372 = vpack.c.b16 %v280, %v279
    %v373 = vpack.c.b16 %v282, %v281
    %v374 = vpack.c.b16 %v284, %v283
    %v375 = vpack.c.b16 %v286, %v285
    %v376 = vpack.c.b16 %v288, %v287
    %v377 = vpack.c.b16 %v290, %v289
    %v378 = vpack.c.b16 %v292, %v291
    %v379 = vpack.c.b16 %v294, %v293
    %v380 = vpack.c.b16 %v296, %v295
    %v381 = vpack.c.b16 %v298, %v297
    %v382 = vpack.c.b16 %v300, %v299
    %v383 = vpack.c.b16 %v302, %v301
    %v384 = vpack.c.b16 %v304, %v303
    %v385 = vpack.c.b16 %v306, %v305
    %v386 = vpack.c.b16 %v308, %v307
    %v387 = vpack.c.b16 %v310, %v309
    %v388 = vpack.c.b16 %v312, %v311
    %v389 = vpack.c.b16 %v314, %v313
    %v390 = vpack.c.b16 %v316, %v315
    %v391 = vpack.c.b16 %v318, %v317
    %v392 = vpack.c.b16 %v320, %v319
    %v393 = vpack.c.b16 %v322, %v321
    %v394 = vpack.c.b16 %v324, %v323
    %v395 = vpack.c.b16 %v326, %v325
    %v396 = vpack.c.b16 %v328, %v327
    %v397 = vpack.c.b16 %v330, %v329
    %v398 = vpack.c.b16 %v332, %v331
    %v399 = vpack.c.b16 %v334, %v333
    %v400 = vpack.c.b16 %v336, %v335
    %v401 = vpack.c.b16 %v338, %v337
    %v402 = vpack.c.b16 %v340, %v339
    %v403 = vpack.c.b16 %v342, %v341
    %v404 = vpack.c.b16 %v344, %v343
    %v405 = vpack.c.b16 %v346, %v345
    %v406 = vpack.c.b16 %v348, %v347
    %v407 = vpack.c.b16 %v350, %v349
    %v408 = vpack.c.b16 %v352, %v351
    %v409 = vpack.c.b16 %v354, %v353
    %v410 = vpack.c.b16 %v356, %v355
    %v411 = vpack.c.b16 %v358, %v357
    %v412 = vpack.c.b16 %v360, %v359
    %v413 = vpack.c.b16 %v362, %v361
    %v414 = vpack.c.b16 %v364, %v363
    %v415 = vpack.c.b16 %v366, %v365
    %v416 = vpack.c.b16 %v368, %v367
    %465 = vmatprep.subr.bf16.mxu0 0
    %466 = vmatpush1.bf16.msra.mxu0 %v369
    %467 = vmatprep.subr.bf16.mxu0 0
    %468 = vmatpush1.bf16.msra.mxu0 %v370
    %469 = vmatprep.subr.bf16.mxu0 0
    %470 = vmatpush1.bf16.msra.mxu0 %v371
    %471 = vmatprep.subr.bf16.mxu0 0
    %472 = vmatpush1.bf16.msra.mxu0 %v372
    %473 = vmatprep.subr.bf16.mxu0 0
    %474 = vmatpush1.bf16.msra.mxu0 %v373
    %475 = vmatprep.subr.bf16.mxu0 0
    %476 = vmatpush1.bf16.msra.mxu0 %v374
    %477 = vmatprep.subr.bf16.mxu0 0
    %478 = vmatpush1.bf16.msra.mxu0 %v375
    %479 = vmatprep.subr.bf16.mxu0 0
    %480 = vmatpush1.bf16.msra.mxu0 %v376
    %481 = vmatprep.subr.bf16.mxu0 0
    %482 = vmatpush1.bf16.msra.mxu0 %v377
    %483 = vmatprep.subr.bf16.mxu0 0
    %484 = vmatpush1.bf16.msra.mxu0 %v378
    %485 = vmatprep.subr.bf16.mxu0 0
    %486 = vmatpush1.bf16.msra.mxu0 %v379
    %487 = vmatprep.subr.bf16.mxu0 0
    %488 = vmatpush1.bf16.msra.mxu0 %v380
    %489 = vmatprep.subr.bf16.mxu0 0
    %490 = vmatpush1.bf16.msra.mxu0 %v381
    %491 = vmatprep.subr.bf16.mxu0 0
    %492 = vmatpush1.bf16.msra.mxu0 %v382
    %493 = vmatprep.subr.bf16.mxu0 0
    %494 = vmatpush1.bf16.msra.mxu0 %v383
    %495 = vmatprep.subr.bf16.mxu0 0
    %496 = vmatpush1.bf16.msra.mxu0 %v384
    %497 = vmatprep.mubr.bf16.mxu0 %v63
    %498 = vmatmul.mubr.bf16.gmra.mrb[0].mxu0 %v62
    %v499 = vpop.f32.mrb[0].mxu0
    %v500 = vadd.f32 %v175, %v499
    %v501 = vpop.f32.mrb[0].mxu0
    %v502 = vpop.f32.mrb[0].mxu0
    %v503 = vadd.f32 %v175, %v502
    %v504 = vpop.f32.mrb[0].mxu0
    %505 = vmatprep.mubr.bf16.mxu0 %v69
    %506 = vmatmul.mubr.bf16.gmra.mrb[0].mxu0 %v68
    %v507 = vpop.f32.mrb[0].mxu0
    %v508 = vadd.f32 %v175, %v507
    %v509 = vpop.f32.mrb[0].mxu0
    %v510 = vpop.f32.mrb[0].mxu0
    %v511 = vpop.f32.mrb[0].mxu0
    %512 = vdwg.mxu0
    %513 = vmatprep.subr.bf16.mxu0 0
    %514 = vmatpush1.bf16.msra.mxu0 %v385
    %515 = vmatprep.subr.bf16.mxu0 0
    %516 = vmatpush1.bf16.msra.mxu0 %v386
    %517 = vmatprep.subr.bf16.mxu0 0
    %518 = vmatpush1.bf16.msra.mxu0 %v387
    %519 = vmatprep.subr.bf16.mxu0 0
    %520 = vmatpush1.bf16.msra.mxu0 %v388
    %521 = vmatprep.subr.bf16.mxu0 0
    %522 = vmatpush1.bf16.msra.mxu0 %v389
    %523 = vmatprep.subr.bf16.mxu0 0
    %524 = vmatpush1.bf16.msra.mxu0 %v390
    %525 = vmatprep.subr.bf16.mxu0 0
    %526 = vmatpush1.bf16.msra.mxu0 %v391
    %527 = vmatprep.subr.bf16.mxu0 0
    %528 = vmatpush1.bf16.msra.mxu0 %v392
    %529 = vmatprep.subr.bf16.mxu0 0
    %530 = vmatpush1.bf16.msra.mxu0 %v393
    %531 = vmatprep.subr.bf16.mxu0 0
    %532 = vmatpush1.bf16.msra.mxu0 %v394
    %533 = vmatprep.subr.bf16.mxu0 0
    %534 = vmatpush1.bf16.msra.mxu0 %v395
    %535 = vmatprep.subr.bf16.mxu0 0
    %536 = vmatpush1.bf16.msra.mxu0 %v396
    %537 = vmatprep.subr.bf16.mxu0 0
    %538 = vmatpush1.bf16.msra.mxu0 %v397
    %539 = vmatprep.subr.bf16.mxu0 0
    %540 = vmatpush1.bf16.msra.mxu0 %v398
    %541 = vmatprep.subr.bf16.mxu0 0
    %542 = vmatpush1.bf16.msra.mxu0 %v399
    %543 = vmatprep.subr.bf16.mxu0 0
    %544 = vmatpush1.bf16.msra.mxu0 %v400
    %545 = vmatprep.mubr.bf16.mxu0 %v65
    %546 = vmatmul.mubr.bf16.gmra.mrb[0].mxu0 %v64
    %v547 = vpop.f32.mrb[0].mxu0
    %v548 = vadd.f32 %v500, %v547
    %v549 = vpop.f32.mrb[0].mxu0
    %v550 = vpop.f32.mrb[0].mxu0
    %v551 = vadd.f32 %v503, %v550
    %v552 = vpop.f32.mrb[0].mxu0
    %553 = vmatprep.mubr.bf16.mxu0 %v71
    %554 = vmatmul.mubr.bf16.gmra.mrb[0].mxu0 %v70
    %v555 = vpop.f32.mrb[0].mxu0
    %v556 = vadd.f32 %v508, %v555
    %v557 = vpop.f32.mrb[0].mxu0
    %v558 = vpop.f32.mrb[0].mxu0
    %v559 = vpop.f32.mrb[0].mxu0
    %560 = vdwg.mxu0
    %561 = vmatprep.subr.bf16.mxu0 0
    %562 = vmatpush1.bf16.msra.mxu0 %v401
    %563 = vmatprep.subr.bf16.mxu0 0
    %564 = vmatpush1.bf16.msra.mxu0 %v402
    %565 = vmatprep.subr.bf16.mxu0 0
    %566 = vmatpush1.bf16.msra.mxu0 %v403
    %567 = vmatprep.subr.bf16.mxu0 0
    %568 = vmatpush1.bf16.msra.mxu0 %v404
    %569 = vmatprep.subr.bf16.mxu0 0
    %570 = vmatpush1.bf16.msra.mxu0 %v405
    %571 = vmatprep.subr.bf16.mxu0 0
    %572 = vmatpush1.bf16.msra.mxu0 %v406
    %573 = vmatprep.subr.bf16.mxu0 0
    %574 = vmatpush1.bf16.msra.mxu0 %v407
    %575 = vmatprep.subr.bf16.mxu0 0
    %576 = vmatpush1.bf16.msra.mxu0 %v408
    %577 = vmatprep.subr.bf16.mxu0 0
    %578 = vmatpush1.bf16.msra.mxu0 %v409
    %579 = vmatprep.subr.bf16.mxu0 0
    %580 = vmatpush1.bf16.msra.mxu0 %v410
    %581 = vmatprep.subr.bf16.mxu0 0
    %582 = vmatpush1.bf16.msra.mxu0 %v411
    %583 = vmatprep.subr.bf16.mxu0 0
    %584 = vmatpush1.bf16.msra.mxu0 %v412
    %585 = vmatprep.subr.bf16.mxu0 0
    %586 = vmatpush1.bf16.msra.mxu0 %v413
    %587 = vmatprep.subr.bf16.mxu0 0
    %588 = vmatpush1.bf16.msra.mxu0 %v414
    %589 = vmatprep.subr.bf16.mxu0 0
    %590 = vmatpush1.bf16.msra.mxu0 %v415
    %591 = vmatprep.subr.bf16.mxu0 0
    %592 = vmatpush1.bf16.msra.mxu0 %v416
    %593 = vmatprep.mubr.bf16.mxu0 %v67
    %594 = vmatmul.mubr.bf16.gmra.mrb[0].mxu0 %v66
    %v595 = vpop.f32.mrb[0].mxu0
    %v596 = vadd.f32 %v548, %v595
    %v597 = vpop.f32.mrb[0].mxu0
    %v598 = vpop.f32.mrb[0].mxu0
    %v599 = vadd.f32 %v551, %v598
    %v600 = vpop.f32.mrb[0].mxu0
    %601 = vmatprep.mubr.bf16.mxu0 %v73
    %602 = vmatmul.mubr.bf16.gmra.mrb[0].mxu0 %v72
    %v603 = vpop.f32.mrb[0].mxu0
    %v604 = vadd.f32 %v556, %v603
    %v605 = vpop.f32.mrb[0].mxu0
    %v606 = vpop.f32.mrb[0].mxu0
    %v607 = vpop.f32.mrb[0].mxu0
    %608 = vdwg.mxu0
    %609 = vst [vmem:[#allocation7] sm:$0xff] %v596
    %610 = vst [vmem:[#allocation7 + $0x8] sm:$0xff] %v599
    %611 = vst [vmem:[#allocation7 + $0x10] sm:$0x3] %v604
    // Predicated region
    $region22: #{tpu_custom_call.1} parent=1 // pred_check
      _
    $region23: #{tpu_custom_call.1} parent=1 // pred_check_branch
      %613 = sbr.rel (0) target = $region25
    $region24: #{tpu_custom_call.1} parent=1 // pred_region
      %s615 = ssub.s32 384, 384
      %616 = vsyncadd [#allocation4], %s615
      %s617 = sshll.u32 [#allocation7], 4
      %s618 = int_to_ptr.vmem [resolvable:$true] %s617
      %623 = dma.vmem_to_hbm [thread:$0]  %s618, 384, %s3, [#allocation4], 128, 128, 8
    $region25: #{tpu_custom_call.1} parent=1 // pred_fallthru
      _
    // Predicated region
    $region26: #{tpu_custom_call.1} parent=1 // pred_check
      _
    $region27: #{tpu_custom_call.1} parent=1 // pred_check_branch
      %625 = sbr.rel (0) target = $region29
    $region28: #{tpu_custom_call.1} parent=1 // pred_region
      %626 = dma.done [#allocation4], 384
    $region29: #{tpu_custom_call.1} parent=1 // pred_fallthru
      _
    %627 = vsyncpa [#allocation3], 1
    %628 = vsyncpa [#allocation6], 1
    %629 = vsyncpa [#allocation4], 1

</llo_original>
